<compile_context>
chip_gen: v5e
topology: v5e:2x2
jax: 0.10.0
libtpu: 0.0.40
codegen_flags: <defaults>
</compile_context>

<pallas_src>
import numpy as np

import jax
import jax.numpy as jnp
from jax.experimental import pallas as pl
from jax.experimental.pallas import tpu as pltpu


def _cdiv(a, b):
    return -(-a // b)


def _round_up(a, b):
    return _cdiv(a, b) * b


def _fused_kernel(x_ref, op_ref, shift_ref, o_ref):
    """TB samples per grid step; one MXU matmul, per-lane affine, Mish.

    x_ref     : (TB, CHW)  bf16  -- TB flattened-NCHW samples
    op_ref    : (CHW, Qp)  bf16  -- (adaptive-avg-pool @ unfolded-conv) * BN scale
    shift_ref : (1, Qp)    f32   -- BN shift per output lane
    o_ref     : (TB, Qp)   f32   -- flattened-NCHW outputs (padded lanes)
    """
    y = jax.lax.dot_general(
        x_ref[...], op_ref[...], (((1,), (0,)), ((), ())),
        preferred_element_type=jnp.float32)                     # (TB, Qp) f32

    y = y + shift_ref[...]                                      # BN (inference) shift

    # Mish: y * tanh(softplus(y)).  tanh(log(1+e)) == ((1+e)^2 - 1) / ((1+e)^2 + 1),
    # so one EUP exp + one approx reciprocal; clamp is exact since tanh==1 for y>20.
    e = jnp.exp(jnp.minimum(y, 20.0))
    u = (1.0 + e) * (1.0 + e)
    t = (u - 1.0) * pl.reciprocal(u + 1.0, approx=True)
    o_ref[...] = (y * t).astype(o_ref.dtype)


def _adaptive_pool_1d(in_size, out_size):
    """(in_size, out_size) linear operator for 1-D adaptive average pooling
    using PyTorch's window rule: [floor(i*I/O), ceil((i+1)*I/O))."""
    A = np.zeros((in_size, out_size), np.float32)
    for o in range(out_size):
        s = (o * in_size) // out_size
        e = -((-(o + 1) * in_size) // out_size)
        A[s:e, o] = 1.0 / (e - s)
    return A


def _choose_batch_tile(n):
    """Rows per grid step: multiple of 16 (bf16 sublane pack), <=256 (MXU rows),
    and at least 2 grid steps when N allows it (v7x has 2 TensorCores)."""
    tb = min(256, _round_up(n, 16))
    if _cdiv(n, tb) < 2 and n > 16:
        tb = max(16, _round_up(_cdiv(n, 2), 16))
    return tb


def simple_conv_aap(x, conv_weight, bn_gamma, bn_beta, bn_mean, bn_var, *,
                    kernel_size=3, stride=1, padding=0, pooling_out=(4, 4), eps=1e-3):
    """Replicates SimpleConvAAP.forward (inference-mode BatchNorm).

    x           : (N, Cin, H, W)        f32 (NCHW, PyTorch convention)
    conv_weight : (Cout, Cin, K, K)     f32 (OIHW, bias=False)
    bn_*        : (Cout,)               BatchNorm2d gamma/beta/running_mean/running_var
    returns     : (N, Cout, Ho, Wo)     f32 (NCHW)
    """
    N, Cin, H, W = x.shape
    Cout = conv_weight.shape[0]
    K = kernel_size
    Ph, Pw = pooling_out
    Ho = (Ph + 2 * padding - K) // stride + 1
    Wo = (Pw + 2 * padding - K) // stride + 1
    assert Ho >= 1 and Wo >= 1, "conv on the pooled map would produce an empty output"

    CHW = Cin * H * W            # flat input lanes per sample
    Q = Cout * Ho * Wo           # flat output lanes per sample
    Qp = _round_up(Q, 128)       # lane-dense padded output width

    # ----- one-time, data-independent operator preprocessing (wrapper, f32) -----
    # Adaptive-avg-pool as a per-channel spatial operator (H*W -> Ph*Pw).
    Ah = _adaptive_pool_1d(H, Ph)                                # (H, Ph)
    Aw = _adaptive_pool_1d(W, Pw)                                # (W, Pw)
    pool4 = jnp.asarray(np.einsum("hp,wq->hwpq", Ah, Aw))        # (H, W, Ph, Pw)

    # im2col / Toeplitz unfolding of the KxK conv over the pooled grid.
    Ih = np.zeros((Ph, Ho, K), np.float32)
    for a in range(Ho):
        for t in range(K):
            ih = a * stride + t - padding
            if 0 <= ih < Ph:
                Ih[ih, a, t] = 1.0
    Iw = np.zeros((Pw, Wo, K), np.float32)
    for b in range(Wo):
        for t in range(K):
            iw = b * stride + t - padding
            if 0 <= iw < Pw:
                Iw[iw, b, t] = 1.0
    # w_unf6[ci, ph, pw, co, ho, wo]
    w_unf6 = jnp.einsum("ocxy,pax,qby->cpqoab",
                        conv_weight.astype(jnp.float32),
                        jnp.asarray(Ih), jnp.asarray(Iw))

    # Fuse pool @ conv in f32 (no kron block-diag; exact MAC count) and fold the
    # BN (inference) scale into the operator columns.
    scale = bn_gamma / jnp.sqrt(bn_var + eps)                    # (Cout,)
    shift = bn_beta - bn_mean * scale
    op6 = jnp.einsum("hwpq,cpqoab->chwoab", pool4, w_unf6)       # (Cin,H,W,Cout,Ho,Wo)
    op6 = op6 * scale[None, None, None, :, None, None]
    op_mat = op6.reshape(CHW, Q)                                 # rows=(ci,h,w), cols=(co,ho,wo)
    op_mat = jnp.pad(op_mat, ((0, 0), (0, Qp - Q))).astype(jnp.bfloat16)   # (CHW, Qp) bf16

    shift_vec = jnp.repeat(shift, Ho * Wo)                       # (Q,)
    shift_vec = jnp.pad(shift_vec, (0, Qp - Q))[None, :].astype(jnp.float32)  # (1, Qp)

    # ----- batch tiling: TB samples per grid step -----
    TB = _choose_batch_tile(N)
    n_steps = _cdiv(N, TB)
    N_pad = n_steps * TB

    x_flat = x.reshape(N, CHW).astype(jnp.bfloat16)              # free reshape of NCHW + wrapper cast
    if N_pad != N:
        x_flat = jnp.pad(x_flat, ((0, N_pad - N), (0, 0)))

    out_flat = pl.pallas_call(
        _fused_kernel,
        out_shape=jax.ShapeDtypeStruct((N_pad, Qp), jnp.float32),
        grid_spec=pltpu.PrefetchScalarGridSpec(
            num_scalar_prefetch=0,
            grid=(n_steps,),                                     # batch axis -> megacore on v7x
            in_specs=[
                pl.BlockSpec((TB, CHW), lambda n: (n, 0)),
                pl.BlockSpec((CHW, Qp), lambda n: (0, 0)),       # constant operand, fetched once
                pl.BlockSpec((1, Qp), lambda n: (0, 0)),
            ],
            out_specs=pl.BlockSpec((TB, Qp), lambda n: (n, 0)),
        ),
        compiler_params=pltpu.CompilerParams(
            dimension_semantics=("parallel",)),
    )(x_flat, op_mat, shift_vec)

    return out_flat[:N, :Q].reshape(N, Cout, Ho, Wo)


if __name__ == "__main__":
    # Module config: SimpleConvAAP(in_channels=4, out_channels=32, kernel_size=3,
    #                              stride=1, padding=0, bias=False, pooling_out=(4,4))
    N, Cin, H, W = 2, 4, 16, 16
    Cout, K, stride, padding = 32, 3, 1, 0
    pooling_out = (4, 4)
    eps = 1e-3

    key = jax.random.PRNGKey(0)
    kx, kw, kg, kb, km, kv = jax.random.split(key, 6)
    x = jax.random.normal(kx, (N, Cin, H, W), dtype=jnp.float32)
    weight = jax.random.normal(kw, (Cout, Cin, K, K), dtype=jnp.float32) * 0.1
    bn_gamma = 1.0 + 0.1 * jax.random.normal(kg, (Cout,), dtype=jnp.float32)
    bn_beta = 0.1 * jax.random.normal(kb, (Cout,), dtype=jnp.float32)
    bn_mean = 0.1 * jax.random.normal(km, (Cout,), dtype=jnp.float32)
    bn_var = 1.0 + 0.2 * jax.random.uniform(kv, (Cout,), dtype=jnp.float32)

    out = simple_conv_aap(x, weight, bn_gamma, bn_beta, bn_mean, bn_var,
                          kernel_size=K, stride=stride, padding=padding,
                          pooling_out=pooling_out, eps=eps)
    out = jax.block_until_ready(out)

    # Reference (pure JAX, f32): AdaptiveAvgPool2d -> Conv2d -> BatchNorm2d(eval) -> Mish.
    Ph, Pw = pooling_out
    pooled_ref = x.reshape(N, Cin, Ph, H // Ph, Pw, W // Pw).mean(axis=(3, 5))
    conv_ref = jax.lax.conv_general_dilated(
        pooled_ref, weight, (stride, stride),
        ((padding, padding), (padding, padding)),
        dimension_numbers=("NCHW", "OIHW", "NCHW"))
    scale_ref = bn_gamma / jnp.sqrt(bn_var + eps)
    shift_ref = bn_beta - bn_mean * scale_ref
    bn_ref = conv_ref * scale_ref[None, :, None, None] + shift_ref[None, :, None, None]
    ref = bn_ref * jnp.tanh(jax.nn.softplus(bn_ref))

    assert out.shape == ref.shape, (out.shape, ref.shape)
    max_err = float(jnp.max(jnp.abs(out - ref)))
    assert jnp.allclose(out, ref, atol=2e-2, rtol=2e-2), max_err

    print("KERNEL_OK")
</pallas_src>

<mosaic_0001>
module attributes {stable_mosaic.version = 11 : i64} {
  func.func @_fused_kernel(%arg0: i32, %arg1: memref<16x1024xbf16, #tpu.memory_space<vmem>>, %arg2: memref<1024x128xbf16, #tpu.memory_space<vmem>>, %arg3: memref<1x128xf32, #tpu.memory_space<vmem>>, %arg4: memref<16x128xf32, #tpu.memory_space<vmem>>) attributes {dimension_semantics = [#tpu.dimension_semantics<parallel>], iteration_bounds = array<i64: 1>, scalar_prefetch = 0 : i64, scratch_operands = 0 : i64, tpu.core_type = #tpu.core_type<tc>, window_params = [{transform_indices = @transform_0, window_bounds = array<i64: 16, 1024>}, {pipeline_mode = #tpu.pipeline_mode<synchronous>, transform_indices = @transform_1, window_bounds = array<i64: 1024, 128>}, {pipeline_mode = #tpu.pipeline_mode<synchronous>, transform_indices = @transform_2, window_bounds = array<i64: 1, 128>}, {transform_indices = @transform_3, window_bounds = array<i64: 16, 128>}]} {
    %c0 = arith.constant 0 : index
    %c0_0 = arith.constant 0 : index
    %0 = vector.load %arg1[%c0, %c0_0] : memref<16x1024xbf16, #tpu.memory_space<vmem>>, vector<16x1024xbf16>
    %c0_1 = arith.constant 0 : index
    %c0_2 = arith.constant 0 : index
    %1 = vector.load %arg2[%c0_1, %c0_2] : memref<1024x128xbf16, #tpu.memory_space<vmem>>, vector<1024x128xbf16>
    %cst = arith.constant dense<0.000000e+00> : vector<16x128xf32>
    %2 = tpu.matmul %0, %1, %cst {dimension_numbers = #tpu.dot_dimension_numbers<[1], [0], [0], [1], [0, 0, 1, 1], [], []>} : vector<16x1024xbf16>, vector<1024x128xbf16>, vector<16x128xf32> -> vector<16x128xf32>
    %c0_3 = arith.constant 0 : index
    %c0_4 = arith.constant 0 : index
    %3 = vector.load %arg3[%c0_3, %c0_4] : memref<1x128xf32, #tpu.memory_space<vmem>>, vector<1x128xf32>
    %4 = vector.broadcast %3 : vector<1x128xf32> to vector<16x128xf32>
    %5 = arith.addf %2, %4 : vector<16x128xf32>
    %cst_5 = arith.constant 2.000000e+01 : f32
    %6 = vector.broadcast %cst_5 : f32 to vector<16x128xf32>
    %7 = arith.minimumf %5, %6 : vector<16x128xf32>
    %8 = math.exp %7 : vector<16x128xf32>
    %cst_6 = arith.constant 1.000000e+00 : f32
    %9 = vector.broadcast %cst_6 : f32 to vector<16x128xf32>
    %10 = arith.addf %9, %8 : vector<16x128xf32>
    %cst_7 = arith.constant 1.000000e+00 : f32
    %11 = vector.broadcast %cst_7 : f32 to vector<16x128xf32>
    %12 = arith.addf %11, %8 : vector<16x128xf32>
    %13 = arith.mulf %10, %12 : vector<16x128xf32>
    %cst_8 = arith.constant 1.000000e+00 : f32
    %14 = vector.broadcast %cst_8 : f32 to vector<16x128xf32>
    %15 = arith.subf %13, %14 : vector<16x128xf32>
    %cst_9 = arith.constant 1.000000e+00 : f32
    %16 = vector.broadcast %cst_9 : f32 to vector<16x128xf32>
    %17 = arith.addf %13, %16 : vector<16x128xf32>
    %18 = tpu.reciprocal %17 {approx = true} : vector<16x128xf32> -> vector<16x128xf32>
    %19 = arith.mulf %15, %18 : vector<16x128xf32>
    %20 = arith.mulf %5, %19 : vector<16x128xf32>
    %c0_10 = arith.constant 0 : index
    %c0_11 = arith.constant 0 : index
    %21 = vector.load %arg4[%c0_10, %c0_11] : memref<16x128xf32, #tpu.memory_space<vmem>>, vector<16x128xf32>
    tpu.vector_store %arg4[%c0_10, %c0_11], %20 {strides = array<i32>} : memref<16x128xf32, #tpu.memory_space<vmem>>, vector<16x128xf32>,
    return
  }
  func.func @transform_0(%arg0: i32) -> (i32, i32) {
    %c0_i32 = arith.constant 0 : i32
    %c0_i32_0 = arith.constant 0 : i32
    return %arg0, %c0_i32 : i32, i32
  }
  func.func @transform_1(%arg0: i32) -> (i32, i32) {
    %c0_i32 = arith.constant 0 : i32
    %c0_i32_0 = arith.constant 0 : i32
    %c0_i32_1 = arith.constant 0 : i32
    return %c0_i32, %c0_i32_0 : i32, i32
  }
  func.func @transform_2(%arg0: i32) -> (i32, i32) {
    %c0_i32 = arith.constant 0 : i32
    %c0_i32_0 = arith.constant 0 : i32
    %c0_i32_1 = arith.constant 0 : i32
    return %c0_i32, %c0_i32_0 : i32, i32
  }
  func.func @transform_3(%arg0: i32) -> (i32, i32) {
    %c0_i32 = arith.constant 0 : i32
    %c0_i32_0 = arith.constant 0 : i32
    return %arg0, %c0_i32 : i32, i32
  }
}

</mosaic_0001>

<llo_original>
// kernel: tpu_custom_call.1
$region0: #{tpu_custom_call.1}
  #allocation0 [shape = 'u32[]', space=smem, size = 0x4, offset = 0x4, fixed_abs, tag = 'smem constant byte address 0x4 - core index']
  #allocation1 [shape = 'u32[72,128]{1,0:T(1,128)}', space=vmem, size = 0x9000, scoped, tag = 'internal scratch']
  %s0 = inlined_call_operand.hbm [shape: bf16[16,1024], index: 0, kind: input, shape index: {}]
  %s1 = inlined_call_operand.hbm [shape: bf16[1024,128], index: 1, kind: input, shape index: {}]
  %s2 = inlined_call_operand.vmem [shape: f32[1,128], index: 2, kind: input, shape index: {}]
  %s3 = inlined_call_operand.hbm [shape: f32[16,128], index: 3, kind: output, shape index: {}]
  %s4 = sld [smem:[#allocation0]]
  $region30: #{tpu_custom_call.1} parent=0
    _
  %s6 = ssub.s32 1, %s4
  %s7 = scalar_select 0, %s6, %s4
  $region1: #{tpu_custom_call.1} parent=0
    #allocation2 [shape = 'u8[32768]{0}', space=vmem, size = 0x8000, scoped, tag = 'input window, operand 0, single buffered']
    #allocation3 [shape = 's32[1]{0}', space=sflag, size = 0x4, scoped, tag = 'scoped memory for tpu_custom_call.1']
    #allocation4 [shape = 's32[1]{0}', space=sflag, size = 0x4, scoped, tag = 'scoped memory for tpu_custom_call.1']
    #allocation5 [shape = 'u8[262144]{0}', space=vmem, size = 0x40000, scoped, tag = 'input window, operand 1, single buffered']
    #allocation6 [shape = 's32[1]{0}', space=sflag, size = 0x4, scoped, tag = 'scoped memory for tpu_custom_call.1']
    #allocation7 [shape = 'u8[8192]{0}', space=vmem, size = 0x2000, scoped, tag = 'output window, operand 0, single buffered']
    %8 = vsyncpa [#allocation3], 0
    %9 = vsyncpa [#allocation6], 0
    %10 = vsyncpa [#allocation4], 0
    // Predicated region
    $region2: #{tpu_custom_call.1} parent=1 // pred_check
      _
    $region3: #{tpu_custom_call.1} parent=1 // pred_check_branch
      %12 = sbr.rel (0) target = $region5
    $region4: #{tpu_custom_call.1} parent=1 // pred_region
      %14 = vsyncadd [#allocation3], 0
      %s15 = sshll.u32 %s0, 4
      %s16 = int_to_ptr.hbm [resolvable:$true] %s15
      %s17 = sshll.u32 [#allocation2], 4
      %s18 = int_to_ptr.vmem [resolvable:$true] %s17
      %23 = dma.hbm_to_vmem [thread:$0]  %s16, 1024, %s18, [#allocation3], 512, 512, 32
    $region5: #{tpu_custom_call.1} parent=1 // pred_fallthru
      _
    // Predicated region
    $region6: #{tpu_custom_call.1} parent=1 // pred_check
      _
    $region7: #{tpu_custom_call.1} parent=1 // pred_check_branch
      %25 = sbr.rel (0) target = $region9
    $region8: #{tpu_custom_call.1} parent=1 // pred_region
      %27 = vsyncadd [#allocation6], 0
      %s28 = sshll.u32 %s1, 4
      %s29 = int_to_ptr.hbm [resolvable:$true] %s28
      %s30 = sshll.u32 [#allocation5], 4
      %s31 = int_to_ptr.vmem [resolvable:$true] %s30
      %36 = dma.hbm_to_vmem [thread:$0]  %s29, 8192, %s31, [#allocation6], 64, 64, 4
    $region9: #{tpu_custom_call.1} parent=1 // pred_fallthru
      _
    // Predicated region
    $region10: #{tpu_custom_call.1} parent=1 // pred_check
      _
    $region11: #{tpu_custom_call.1} parent=1 // pred_check_branch
      %38 = sbr.rel (0) target = $region13
    $region12: #{tpu_custom_call.1} parent=1 // pred_region
      _
    $region13: #{tpu_custom_call.1} parent=1 // pred_fallthru
      _
    // Predicated region
    $region14: #{tpu_custom_call.1} parent=1 // pred_check
      _
    $region15: #{tpu_custom_call.1} parent=1 // pred_check_branch
      %40 = sbr.rel (0) target = $region17
    $region16: #{tpu_custom_call.1} parent=1 // pred_region
      %42 = dma.done [#allocation3], 1024
    $region17: #{tpu_custom_call.1} parent=1 // pred_fallthru
      _
    // Predicated region
    $region18: #{tpu_custom_call.1} parent=1 // pred_check
      _
    $region19: #{tpu_custom_call.1} parent=1 // pred_check_branch
      %44 = sbr.rel (0) target = $region21
    $region20: #{tpu_custom_call.1} parent=1 // pred_region
      %46 = dma.done [#allocation6], 8192
    $region21: #{tpu_custom_call.1} parent=1 // pred_fallthru
      _
    %v47 = vld [vmem:[#allocation2] sm:$0xff]
    %v48 = vld [vmem:[#allocation2 + $0x8] sm:$0xff]
    %v49 = vld [vmem:[#allocation2 + $0x10] sm:$0xff]
    %v50 = vld [vmem:[#allocation2 + $0x18] sm:$0xff]
    %v51 = vld [vmem:[#allocation2 + $0x20] sm:$0xff]
    %v52 = vld [vmem:[#allocation2 + $0x28] sm:$0xff]
    %v53 = vld [vmem:[#allocation2 + $0x30] sm:$0xff]
    %v54 = vld [vmem:[#allocation2 + $0x38] sm:$0xff]
    %v55 = vld [vmem:[#allocation5] sm:$0xf]
    %v56 = vld [vmem:[#allocation5 + $0x4] sm:$0xf]
    %v57 = vld [vmem:[#allocation5 + $0x8] sm:$0xf]
    %v58 = vld [vmem:[#allocation5 + $0xc] sm:$0xf]
    %v59 = vld [vmem:[#allocation5 + $0x10] sm:$0xf]
    %v60 = vld [vmem:[#allocation5 + $0x14] sm:$0xf]
    %v61 = vld [vmem:[#allocation5 + $0x18] sm:$0xf]
    %v62 = vld [vmem:[#allocation5 + $0x1c] sm:$0xf]
    %v63 = vld [vmem:[#allocation5 + $0x20] sm:$0xf]
    %v64 = vld [vmem:[#allocation5 + $0x24] sm:$0xf]
    %v65 = vld [vmem:[#allocation5 + $0x28] sm:$0xf]
    %v66 = vld [vmem:[#allocation5 + $0x2c] sm:$0xf]
    %v67 = vld [vmem:[#allocation5 + $0x30] sm:$0xf]
    %v68 = vld [vmem:[#allocation5 + $0x34] sm:$0xf]
    %v69 = vld [vmem:[#allocation5 + $0x38] sm:$0xf]
    %v70 = vld [vmem:[#allocation5 + $0x3c] sm:$0xf]
    %v71 = vld [vmem:[#allocation5 + $0x40] sm:$0xf]
    %v72 = vld [vmem:[#allocation5 + $0x44] sm:$0xf]
    %v73 = vld [vmem:[#allocation5 + $0x48] sm:$0xf]
    %v74 = vld [vmem:[#allocation5 + $0x4c] sm:$0xf]
    %v75 = vld [vmem:[#allocation5 + $0x50] sm:$0xf]
    %v76 = vld [vmem:[#allocation5 + $0x54] sm:$0xf]
    %v77 = vld [vmem:[#allocation5 + $0x58] sm:$0xf]
    %v78 = vld [vmem:[#allocation5 + $0x5c] sm:$0xf]
    %v79 = vld [vmem:[#allocation5 + $0x60] sm:$0xf]
    %v80 = vld [vmem:[#allocation5 + $0x64] sm:$0xf]
    %v81 = vld [vmem:[#allocation5 + $0x68] sm:$0xf]
    %v82 = vld [vmem:[#allocation5 + $0x6c] sm:$0xf]
    %v83 = vld [vmem:[#allocation5 + $0x70] sm:$0xf]
    %v84 = vld [vmem:[#allocation5 + $0x74] sm:$0xf]
    %v85 = vld [vmem:[#allocation5 + $0x78] sm:$0xf]
    %v86 = vld [vmem:[#allocation5 + $0x7c] sm:$0xf]
    %v87 = vld [vmem:[#allocation5 + $0x80] sm:$0xf]
    %v88 = vld [vmem:[#allocation5 + $0x84] sm:$0xf]
    %v89 = vld [vmem:[#allocation5 + $0x88] sm:$0xf]
    %v90 = vld [vmem:[#allocation5 + $0x8c] sm:$0xf]
    %v91 = vld [vmem:[#allocation5 + $0x90] sm:$0xf]
    %v92 = vld [vmem:[#allocation5 + $0x94] sm:$0xf]
    %v93 = vld [vmem:[#allocation5 + $0x98] sm:$0xf]
    %v94 = vld [vmem:[#allocation5 + $0x9c] sm:$0xf]
    %v95 = vld [vmem:[#allocation5 + $0xa0] sm:$0xf]
    %v96 = vld [vmem:[#allocation5 + $0xa4] sm:$0xf]
    %v97 = vld [vmem:[#allocation5 + $0xa8] sm:$0xf]
    %v98 = vld [vmem:[#allocation5 + $0xac] sm:$0xf]
    %v99 = vld [vmem:[#allocation5 + $0xb0] sm:$0xf]
    %v100 = vld [vmem:[#allocation5 + $0xb4] sm:$0xf]
    %v101 = vld [vmem:[#allocation5 + $0xb8] sm:$0xf]
    %v102 = vld [vmem:[#allocation5 + $0xbc] sm:$0xf]
    %v103 = vld [vmem:[#allocation5 + $0xc0] sm:$0xf]
    %v104 = vld [vmem:[#allocation5 + $0xc4] sm:$0xf]
    %v105 = vld [vmem:[#allocation5 + $0xc8] sm:$0xf]
    %v106 = vld [vmem:[#allocation5 + $0xcc] sm:$0xf]
    %v107 = vld [vmem:[#allocation5 + $0xd0] sm:$0xf]
    %v108 = vld [vmem:[#allocation5 + $0xd4] sm:$0xf]
    %v109 = vld [vmem:[#allocation5 + $0xd8] sm:$0xf]
    %v110 = vld [vmem:[#allocation5 + $0xdc] sm:$0xf]
    %v111 = vld [vmem:[#allocation5 + $0xe0] sm:$0xf]
    %v112 = vld [vmem:[#allocation5 + $0xe4] sm:$0xf]
    %v113 = vld [vmem:[#allocation5 + $0xe8] sm:$0xf]
    %v114 = vld [vmem:[#allocation5 + $0xec] sm:$0xf]
    %v115 = vld [vmem:[#allocation5 + $0xf0] sm:$0xf]
    %v116 = vld [vmem:[#allocation5 + $0xf4] sm:$0xf]
    %v117 = vld [vmem:[#allocation5 + $0xf8] sm:$0xf]
    %v118 = vld [vmem:[#allocation5 + $0xfc] sm:$0xf]
    %v119 = vld [vmem:[#allocation5 + $0x100] sm:$0xf]
    %v120 = vld [vmem:[#allocation5 + $0x104] sm:$0xf]
    %v121 = vld [vmem:[#allocation5 + $0x108] sm:$0xf]
    %v122 = vld [vmem:[#allocation5 + $0x10c] sm:$0xf]
    %v123 = vld [vmem:[#allocation5 + $0x110] sm:$0xf]
    %v124 = vld [vmem:[#allocation5 + $0x114] sm:$0xf]
    %v125 = vld [vmem:[#allocation5 + $0x118] sm:$0xf]
    %v126 = vld [vmem:[#allocation5 + $0x11c] sm:$0xf]
    %v127 = vld [vmem:[#allocation5 + $0x120] sm:$0xf]
    %v128 = vld [vmem:[#allocation5 + $0x124] sm:$0xf]
    %v129 = vld [vmem:[#allocation5 + $0x128] sm:$0xf]
    %v130 = vld [vmem:[#allocation5 + $0x12c] sm:$0xf]
    %v131 = vld [vmem:[#allocation5 + $0x130] sm:$0xf]
    %v132 = vld [vmem:[#allocation5 + $0x134] sm:$0xf]
    %v133 = vld [vmem:[#allocation5 + $0x138] sm:$0xf]
    %v134 = vld [vmem:[#allocation5 + $0x13c] sm:$0xf]
    %v135 = vld [vmem:[#allocation5 + $0x140] sm:$0xf]
    %v136 = vld [vmem:[#allocation5 + $0x144] sm:$0xf]
    %v137 = vld [vmem:[#allocation5 + $0x148] sm:$0xf]
    %v138 = vld [vmem:[#allocation5 + $0x14c] sm:$0xf]
    %v139 = vld [vmem:[#allocation5 + $0x150] sm:$0xf]
    %v140 = vld [vmem:[#allocation5 + $0x154] sm:$0xf]
    %v141 = vld [vmem:[#allocation5 + $0x158] sm:$0xf]
    %v142 = vld [vmem:[#allocation5 + $0x15c] sm:$0xf]
    %v143 = vld [vmem:[#allocation5 + $0x160] sm:$0xf]
    %v144 = vld [vmem:[#allocation5 + $0x164] sm:$0xf]
    %v145 = vld [vmem:[#allocation5 + $0x168] sm:$0xf]
    %v146 = vld [vmem:[#allocation5 + $0x16c] sm:$0xf]
    %v147 = vld [vmem:[#allocation5 + $0x170] sm:$0xf]
    %v148 = vld [vmem:[#allocation5 + $0x174] sm:$0xf]
    %v149 = vld [vmem:[#allocation5 + $0x178] sm:$0xf]
    %v150 = vld [vmem:[#allocation5 + $0x17c] sm:$0xf]
    %v151 = vld [vmem:[#allocation5 + $0x180] sm:$0xf]
    %v152 = vld [vmem:[#allocation5 + $0x184] sm:$0xf]
    %v153 = vld [vmem:[#allocation5 + $0x188] sm:$0xf]
    %v154 = vld [vmem:[#allocation5 + $0x18c] sm:$0xf]
    %v155 = vld [vmem:[#allocation5 + $0x190] sm:$0xf]
    %v156 = vld [vmem:[#allocation5 + $0x194] sm:$0xf]
    %v157 = vld [vmem:[#allocation5 + $0x198] sm:$0xf]
    %v158 = vld [vmem:[#allocation5 + $0x19c] sm:$0xf]
    %v159 = vld [vmem:[#allocation5 + $0x1a0] sm:$0xf]
    %v160 = vld [vmem:[#allocation5 + $0x1a4] sm:$0xf]
    %v161 = vld [vmem:[#allocation5 + $0x1a8] sm:$0xf]
    %v162 = vld [vmem:[#allocation5 + $0x1ac] sm:$0xf]
    %v163 = vld [vmem:[#allocation5 + $0x1b0] sm:$0xf]
    %v164 = vld [vmem:[#allocation5 + $0x1b4] sm:$0xf]
    %v165 = vld [vmem:[#allocation5 + $0x1b8] sm:$0xf]
    %v166 = vld [vmem:[#allocation5 + $0x1bc] sm:$0xf]
    %v167 = vld [vmem:[#allocation5 + $0x1c0] sm:$0xf]
    %v168 = vld [vmem:[#allocation5 + $0x1c4] sm:$0xf]
    %v169 = vld [vmem:[#allocation5 + $0x1c8] sm:$0xf]
    %v170 = vld [vmem:[#allocation5 + $0x1cc] sm:$0xf]
    %v171 = vld [vmem:[#allocation5 + $0x1d0] sm:$0xf]
    %v172 = vld [vmem:[#allocation5 + $0x1d4] sm:$0xf]
    %v173 = vld [vmem:[#allocation5 + $0x1d8] sm:$0xf]
    %v174 = vld [vmem:[#allocation5 + $0x1dc] sm:$0xf]
    %v175 = vld [vmem:[#allocation5 + $0x1e0] sm:$0xf]
    %v176 = vld [vmem:[#allocation5 + $0x1e4] sm:$0xf]
    %v177 = vld [vmem:[#allocation5 + $0x1e8] sm:$0xf]
    %v178 = vld [vmem:[#allocation5 + $0x1ec] sm:$0xf]
    %v179 = vld [vmem:[#allocation5 + $0x1f0] sm:$0xf]
    %v180 = vld [vmem:[#allocation5 + $0x1f4] sm:$0xf]
    %v181 = vld [vmem:[#allocation5 + $0x1f8] sm:$0xf]
    %v182 = vld [vmem:[#allocation5 + $0x1fc] sm:$0xf]
    %v183 = vld [vmem:[%s2] sm:$0x1]
    %v185 = vperm.slane %v183, 0
    %v195 = vunpack.c.l.b16 %v47
    %v196 = vunpack.c.h.b16 %v47
    %v197 = vunpack.c.l.b16 %v48
    %v198 = vunpack.c.h.b16 %v48
    %v199 = vunpack.c.l.b16 %v49
    %v200 = vunpack.c.h.b16 %v49
    %v201 = vunpack.c.l.b16 %v50
    %v202 = vunpack.c.h.b16 %v50
    %v203 = vunpack.c.l.b16 %v51
    %v204 = vunpack.c.h.b16 %v51
    %v205 = vunpack.c.l.b16 %v52
    %v206 = vunpack.c.h.b16 %v52
    %v207 = vunpack.c.l.b16 %v53
    %v208 = vunpack.c.h.b16 %v53
    %v209 = vunpack.c.l.b16 %v54
    %v210 = vunpack.c.h.b16 %v54
    %v211 = vpack.c.b16 %v203, %v195
    %v212 = vpack.c.b16 %v204, %v196
    %v213 = vpack.c.b16 %v205, %v197
    %v214 = vpack.c.b16 %v206, %v198
    %v215 = vpack.c.b16 %v207, %v199
    %v216 = vpack.c.b16 %v208, %v200
    %v217 = vpack.c.b16 %v209, %v201
    %v218 = vpack.c.b16 %v210, %v202
    %v355 = vunpack.c.l.b16 %v55
    %v356 = vunpack.c.l.b16 %v56
    %v357 = vunpack.c.l.b16 %v57
    %v358 = vunpack.c.l.b16 %v58
    %v359 = vunpack.c.l.b16 %v59
    %v360 = vunpack.c.l.b16 %v60
    %v361 = vunpack.c.l.b16 %v61
    %v362 = vunpack.c.l.b16 %v62
    %v363 = vunpack.c.l.b16 %v63
    %v364 = vunpack.c.l.b16 %v64
    %v365 = vunpack.c.l.b16 %v65
    %v366 = vunpack.c.l.b16 %v66
    %v367 = vunpack.c.l.b16 %v67
    %v368 = vunpack.c.l.b16 %v68
    %v369 = vunpack.c.l.b16 %v69
    %v370 = vunpack.c.l.b16 %v70
    %v371 = vunpack.c.l.b16 %v71
    %v372 = vunpack.c.l.b16 %v72
    %v373 = vunpack.c.l.b16 %v73
    %v374 = vunpack.c.l.b16 %v74
    %v375 = vunpack.c.l.b16 %v75
    %v376 = vunpack.c.l.b16 %v76
    %v377 = vunpack.c.l.b16 %v77
    %v378 = vunpack.c.l.b16 %v78
    %v379 = vunpack.c.l.b16 %v79
    %v380 = vunpack.c.l.b16 %v80
    %v381 = vunpack.c.l.b16 %v81
    %v382 = vunpack.c.l.b16 %v82
    %v383 = vunpack.c.l.b16 %v83
    %v384 = vunpack.c.l.b16 %v84
    %v385 = vunpack.c.l.b16 %v85
    %v386 = vunpack.c.l.b16 %v86
    %v387 = vunpack.c.l.b16 %v87
    %v388 = vunpack.c.l.b16 %v88
    %v389 = vunpack.c.l.b16 %v89
    %v390 = vunpack.c.l.b16 %v90
    %v391 = vunpack.c.l.b16 %v91
    %v392 = vunpack.c.l.b16 %v92
    %v393 = vunpack.c.l.b16 %v93
    %v394 = vunpack.c.l.b16 %v94
    %v395 = vunpack.c.l.b16 %v95
    %v396 = vunpack.c.l.b16 %v96
    %v397 = vunpack.c.l.b16 %v97
    %v398 = vunpack.c.l.b16 %v98
    %v399 = vunpack.c.l.b16 %v99
    %v400 = vunpack.c.l.b16 %v100
    %v401 = vunpack.c.l.b16 %v101
    %v402 = vunpack.c.l.b16 %v102
    %v403 = vunpack.c.l.b16 %v103
    %v404 = vunpack.c.l.b16 %v104
    %v405 = vunpack.c.l.b16 %v105
    %v406 = vunpack.c.l.b16 %v106
    %v407 = vunpack.c.l.b16 %v107
    %v408 = vunpack.c.l.b16 %v108
    %v409 = vunpack.c.l.b16 %v109
    %v410 = vunpack.c.l.b16 %v110
    %v411 = vunpack.c.l.b16 %v111
    %v412 = vunpack.c.l.b16 %v112
    %v413 = vunpack.c.l.b16 %v113
    %v414 = vunpack.c.l.b16 %v114
    %v415 = vunpack.c.l.b16 %v115
    %v416 = vunpack.c.l.b16 %v116
    %v417 = vunpack.c.l.b16 %v117
    %v418 = vunpack.c.l.b16 %v118
    %v419 = vunpack.c.l.b16 %v119
    %v420 = vunpack.c.l.b16 %v120
    %v421 = vunpack.c.l.b16 %v121
    %v422 = vunpack.c.l.b16 %v122
    %v423 = vunpack.c.l.b16 %v123
    %v424 = vunpack.c.l.b16 %v124
    %v425 = vunpack.c.l.b16 %v125
    %v426 = vunpack.c.l.b16 %v126
    %v427 = vunpack.c.l.b16 %v127
    %v428 = vunpack.c.l.b16 %v128
    %v429 = vunpack.c.l.b16 %v129
    %v430 = vunpack.c.l.b16 %v130
    %v431 = vunpack.c.l.b16 %v131
    %v432 = vunpack.c.l.b16 %v132
    %v433 = vunpack.c.l.b16 %v133
    %v434 = vunpack.c.l.b16 %v134
    %v435 = vunpack.c.l.b16 %v135
    %v436 = vunpack.c.l.b16 %v136
    %v437 = vunpack.c.l.b16 %v137
    %v438 = vunpack.c.l.b16 %v138
    %v439 = vunpack.c.l.b16 %v139
    %v440 = vunpack.c.l.b16 %v140
    %v441 = vunpack.c.l.b16 %v141
    %v442 = vunpack.c.l.b16 %v142
    %v443 = vunpack.c.l.b16 %v143
    %v444 = vunpack.c.l.b16 %v144
    %v445 = vunpack.c.l.b16 %v145
    %v446 = vunpack.c.l.b16 %v146
    %v447 = vunpack.c.l.b16 %v147
    %v448 = vunpack.c.l.b16 %v148
    %v449 = vunpack.c.l.b16 %v149
    %v450 = vunpack.c.l.b16 %v150
    %v451 = vunpack.c.l.b16 %v151
    %v452 = vunpack.c.l.b16 %v152
    %v453 = vunpack.c.l.b16 %v153
    %v454 = vunpack.c.l.b16 %v154
    %v455 = vunpack.c.l.b16 %v155
    %v456 = vunpack.c.l.b16 %v156
    %v457 = vunpack.c.l.b16 %v157
    %v458 = vunpack.c.l.b16 %v158
    %v459 = vunpack.c.l.b16 %v159
    %v460 = vunpack.c.l.b16 %v160
    %v461 = vunpack.c.l.b16 %v161
    %v462 = vunpack.c.l.b16 %v162
    %v463 = vunpack.c.l.b16 %v163
    %v464 = vunpack.c.l.b16 %v164
    %v465 = vunpack.c.l.b16 %v165
    %v466 = vunpack.c.l.b16 %v166
    %v467 = vunpack.c.l.b16 %v167
    %v468 = vunpack.c.l.b16 %v168
    %v469 = vunpack.c.l.b16 %v169
    %v470 = vunpack.c.l.b16 %v170
    %v471 = vunpack.c.l.b16 %v171
    %v472 = vunpack.c.l.b16 %v172
    %v473 = vunpack.c.l.b16 %v173
    %v474 = vunpack.c.l.b16 %v174
    %v475 = vunpack.c.l.b16 %v175
    %v476 = vunpack.c.l.b16 %v176
    %v477 = vunpack.c.l.b16 %v177
    %v478 = vunpack.c.l.b16 %v178
    %v479 = vunpack.c.l.b16 %v179
    %v480 = vunpack.c.l.b16 %v180
    %v481 = vunpack.c.l.b16 %v181
    %v482 = vunpack.c.l.b16 %v182
    %v483 = vpack.c.b16 %v356, %v355
    %v484 = vpack.c.b16 %v358, %v357
    %v485 = vpack.c.b16 %v360, %v359
    %v486 = vpack.c.b16 %v362, %v361
    %v487 = vpack.c.b16 %v364, %v363
    %v488 = vpack.c.b16 %v366, %v365
    %v489 = vpack.c.b16 %v368, %v367
    %v490 = vpack.c.b16 %v370, %v369
    %v491 = vpack.c.b16 %v372, %v371
    %v492 = vpack.c.b16 %v374, %v373
    %v493 = vpack.c.b16 %v376, %v375
    %v494 = vpack.c.b16 %v378, %v377
    %v495 = vpack.c.b16 %v380, %v379
    %v496 = vpack.c.b16 %v382, %v381
    %v497 = vpack.c.b16 %v384, %v383
    %v498 = vpack.c.b16 %v386, %v385
    %v499 = vpack.c.b16 %v388, %v387
    %v500 = vpack.c.b16 %v390, %v389
    %v501 = vpack.c.b16 %v392, %v391
    %v502 = vpack.c.b16 %v394, %v393
    %v503 = vpack.c.b16 %v396, %v395
    %v504 = vpack.c.b16 %v398, %v397
    %v505 = vpack.c.b16 %v400, %v399
    %v506 = vpack.c.b16 %v402, %v401
    %v507 = vpack.c.b16 %v404, %v403
    %v508 = vpack.c.b16 %v406, %v405
    %v509 = vpack.c.b16 %v408, %v407
    %v510 = vpack.c.b16 %v410, %v409
    %v511 = vpack.c.b16 %v412, %v411
    %v512 = vpack.c.b16 %v414, %v413
    %v513 = vpack.c.b16 %v416, %v415
    %v514 = vpack.c.b16 %v418, %v417
    %v515 = vpack.c.b16 %v420, %v419
    %v516 = vpack.c.b16 %v422, %v421
    %v517 = vpack.c.b16 %v424, %v423
    %v518 = vpack.c.b16 %v426, %v425
    %v519 = vpack.c.b16 %v428, %v427
    %v520 = vpack.c.b16 %v430, %v429
    %v521 = vpack.c.b16 %v432, %v431
    %v522 = vpack.c.b16 %v434, %v433
    %v523 = vpack.c.b16 %v436, %v435
    %v524 = vpack.c.b16 %v438, %v437
    %v525 = vpack.c.b16 %v440, %v439
    %v526 = vpack.c.b16 %v442, %v441
    %v527 = vpack.c.b16 %v444, %v443
    %v528 = vpack.c.b16 %v446, %v445
    %v529 = vpack.c.b16 %v448, %v447
    %v530 = vpack.c.b16 %v450, %v449
    %v531 = vpack.c.b16 %v452, %v451
    %v532 = vpack.c.b16 %v454, %v453
    %v533 = vpack.c.b16 %v456, %v455
    %v534 = vpack.c.b16 %v458, %v457
    %v535 = vpack.c.b16 %v460, %v459
    %v536 = vpack.c.b16 %v462, %v461
    %v537 = vpack.c.b16 %v464, %v463
    %v538 = vpack.c.b16 %v466, %v465
    %v539 = vpack.c.b16 %v468, %v467
    %v540 = vpack.c.b16 %v470, %v469
    %v541 = vpack.c.b16 %v472, %v471
    %v542 = vpack.c.b16 %v474, %v473
    %v543 = vpack.c.b16 %v476, %v475
    %v544 = vpack.c.b16 %v478, %v477
    %v545 = vpack.c.b16 %v480, %v479
    %v546 = vpack.c.b16 %v482, %v481
    %611 = vmatpush.bf16.msra.mxu0 %v490
    %612 = vmatpush.bf16.msra.mxu0 %v489
    %613 = vmatpush.bf16.msra.mxu0 %v488
    %614 = vmatpush.bf16.msra.mxu0 %v487
    %615 = vmatpush.bf16.msra.mxu0 %v486
    %616 = vmatpush.bf16.msra.mxu0 %v485
    %617 = vmatpush.bf16.msra.mxu0 %v484
    %618 = vmatpush.bf16.msra.mxu0 %v483
    %619 = vmatmul.bf16.gmra.mxu0 %v211
    %v620 = vpop.f32.mrf.mxu0
    %v621 = vadd.f32 %v185, %v620
    %v622 = vpop.f32.mrf.mxu0
    %v623 = vadd.f32 %v185, %v622
    %624 = vdwg.mxu0
    %625 = vmatpush.bf16.msra.mxu0 %v498
    %626 = vmatpush.bf16.msra.mxu0 %v497
    %627 = vmatpush.bf16.msra.mxu0 %v496
    %628 = vmatpush.bf16.msra.mxu0 %v495
    %629 = vmatpush.bf16.msra.mxu0 %v494
    %630 = vmatpush.bf16.msra.mxu0 %v493
    %631 = vmatpush.bf16.msra.mxu0 %v492
    %632 = vmatpush.bf16.msra.mxu0 %v491
    %633 = vmatmul.bf16.gmra.mxu0 %v212
    %v634 = vpop.f32.mrf.mxu0
    %v635 = vadd.f32 %v621, %v634
    %v636 = vpop.f32.mrf.mxu0
    %v637 = vadd.f32 %v623, %v636
    %638 = vdwg.mxu0
    %639 = vmatpush.bf16.msra.mxu0 %v506
    %640 = vmatpush.bf16.msra.mxu0 %v505
    %641 = vmatpush.bf16.msra.mxu0 %v504
    %642 = vmatpush.bf16.msra.mxu0 %v503
    %643 = vmatpush.bf16.msra.mxu0 %v502
    %644 = vmatpush.bf16.msra.mxu0 %v501
    %645 = vmatpush.bf16.msra.mxu0 %v500
    %646 = vmatpush.bf16.msra.mxu0 %v499
    %647 = vmatmul.bf16.gmra.mxu0 %v213
    %v648 = vpop.f32.mrf.mxu0
    %v649 = vadd.f32 %v635, %v648
    %v650 = vpop.f32.mrf.mxu0
    %v651 = vadd.f32 %v637, %v650
    %652 = vdwg.mxu0
    %653 = vmatpush.bf16.msra.mxu0 %v514
    %654 = vmatpush.bf16.msra.mxu0 %v513
    %655 = vmatpush.bf16.msra.mxu0 %v512
    %656 = vmatpush.bf16.msra.mxu0 %v511
    %657 = vmatpush.bf16.msra.mxu0 %v510
    %658 = vmatpush.bf16.msra.mxu0 %v509
    %659 = vmatpush.bf16.msra.mxu0 %v508
    %660 = vmatpush.bf16.msra.mxu0 %v507
    %661 = vmatmul.bf16.gmra.mxu0 %v214
    %v662 = vpop.f32.mrf.mxu0
    %v663 = vadd.f32 %v649, %v662
    %v664 = vpop.f32.mrf.mxu0
    %v665 = vadd.f32 %v651, %v664
    %666 = vdwg.mxu0
    %667 = vmatpush.bf16.msra.mxu0 %v522
    %668 = vmatpush.bf16.msra.mxu0 %v521
    %669 = vmatpush.bf16.msra.mxu0 %v520
    %670 = vmatpush.bf16.msra.mxu0 %v519
    %671 = vmatpush.bf16.msra.mxu0 %v518
    %672 = vmatpush.bf16.msra.mxu0 %v517
    %673 = vmatpush.bf16.msra.mxu0 %v516
    %674 = vmatpush.bf16.msra.mxu0 %v515
    %675 = vmatmul.bf16.gmra.mxu0 %v215
    %v676 = vpop.f32.mrf.mxu0
    %v677 = vadd.f32 %v663, %v676
    %v678 = vpop.f32.mrf.mxu0
    %v679 = vadd.f32 %v665, %v678
    %680 = vdwg.mxu0
    %681 = vmatpush.bf16.msra.mxu0 %v530
    %682 = vmatpush.bf16.msra.mxu0 %v529
    %683 = vmatpush.bf16.msra.mxu0 %v528
    %684 = vmatpush.bf16.msra.mxu0 %v527
    %685 = vmatpush.bf16.msra.mxu0 %v526
    %686 = vmatpush.bf16.msra.mxu0 %v525
    %687 = vmatpush.bf16.msra.mxu0 %v524
    %688 = vmatpush.bf16.msra.mxu0 %v523
    %689 = vmatmul.bf16.gmra.mxu0 %v216
    %v690 = vpop.f32.mrf.mxu0
    %v691 = vadd.f32 %v677, %v690
    %v692 = vpop.f32.mrf.mxu0
    %v693 = vadd.f32 %v679, %v692
    %694 = vdwg.mxu0
    %695 = vmatpush.bf16.msra.mxu0 %v538
    %696 = vmatpush.bf16.msra.mxu0 %v537
    %697 = vmatpush.bf16.msra.mxu0 %v536
    %698 = vmatpush.bf16.msra.mxu0 %v535
    %699 = vmatpush.bf16.msra.mxu0 %v534
    %700 = vmatpush.bf16.msra.mxu0 %v533
    %701 = vmatpush.bf16.msra.mxu0 %v532
    %702 = vmatpush.bf16.msra.mxu0 %v531
    %703 = vmatmul.bf16.gmra.mxu0 %v217
    %v704 = vpop.f32.mrf.mxu0
    %v705 = vadd.f32 %v691, %v704
    %v706 = vpop.f32.mrf.mxu0
    %v707 = vadd.f32 %v693, %v706
    %708 = vdwg.mxu0
    %709 = vmatpush.bf16.msra.mxu0 %v546
    %710 = vmatpush.bf16.msra.mxu0 %v545
    %711 = vmatpush.bf16.msra.mxu0 %v544
    %712 = vmatpush.bf16.msra.mxu0 %v543
    %713 = vmatpush.bf16.msra.mxu0 %v542
    %714 = vmatpush.bf16.msra.mxu0 %v541
    %715 = vmatpush.bf16.msra.mxu0 %v540
    %716 = vmatpush.bf16.msra.mxu0 %v539
    %717 = vmatmul.bf16.gmra.mxu0 %v218
    %v718 = vpop.f32.mrf.mxu0
    %v719 = vadd.f32 %v705, %v718
    %v720 = vpop.f32.mrf.mxu0
    %v721 = vadd.f32 %v707, %v720
    %722 = vdwg.mxu0
    %v723 = vmin.f32 %v719, 20.0
    %v724 = vmin.f32 %v721, 20.0
    %v725 = vmul.f32 %v723, 1.442695
    %v726 = vpow.pop %v725
    %v727 = vmul.f32 %v724, 1.442695
    %v728 = vpow.pop %v727
    %v729 = vadd.f32 %v726, 1.0
    %v730 = vadd.f32 %v728, 1.0
    %v731 = vmul.f32 %v729, %v729
    %v732 = vmul.f32 %v730, %v730
    %v733 = vsub.f32 %v731, 1.0
    %v734 = vsub.f32 %v732, 1.0
    %v735 = vadd.f32 %v731, 1.0
    %v736 = vadd.f32 %v732, 1.0
    %v737 = vrcp.pop %v735
    %v738 = vrcp.pop %v736
    %v739 = vmul.f32 %v733, %v737
    %v740 = vmul.f32 %v734, %v738
    %v741 = vmul.f32 %v719, %v739
    %v742 = vmul.f32 %v721, %v740
    %743 = vst [vmem:[#allocation7] sm:$0xff] %v741
    %744 = vst [vmem:[#allocation7 + $0x8] sm:$0xff] %v742
    // Predicated region
    $region22: #{tpu_custom_call.1} parent=1 // pred_check
      _
    $region23: #{tpu_custom_call.1} parent=1 // pred_check_branch
      %746 = sbr.rel (0) target = $region25
    $region24: #{tpu_custom_call.1} parent=1 // pred_region
      %748 = vsyncadd [#allocation4], 0
      %s749 = sshll.u32 [#allocation7], 4
      %s750 = int_to_ptr.vmem [resolvable:$true] %s749
      %s751 = sshll.u32 %s3, 4
      %s752 = int_to_ptr.hbm [resolvable:$true] %s751
      %757 = dma.vmem_to_hbm [thread:$0]  %s750, 256, %s752, [#allocation4], 128, 128, 8
    $region25: #{tpu_custom_call.1} parent=1 // pred_fallthru
      _
    // Predicated region
    $region26: #{tpu_custom_call.1} parent=1 // pred_check
      _
    $region27: #{tpu_custom_call.1} parent=1 // pred_check_branch
      %759 = sbr.rel (0) target = $region29
    $region28: #{tpu_custom_call.1} parent=1 // pred_region
      %761 = dma.done [#allocation4], 256
    $region29: #{tpu_custom_call.1} parent=1 // pred_fallthru
      _
    %762 = vsyncpa [#allocation3], 1
    %763 = vsyncpa [#allocation6], 1
    %764 = vsyncpa [#allocation4], 1

</llo_original>
